<compile_context>
chip_gen: v7x
topology: tpu7x:2x2x1
jax: 0.10.0
libtpu: 0.0.40
codegen_flags: <defaults>
</compile_context>

<pallas_src>
import functools

import jax
import jax.numpy as jnp
from jax import lax
from jax.experimental import pallas as pl
from jax.experimental.pallas import tpu as pltpu

EPS = 1e-3  # BatchNorm2d(64, eps=0.001)


def bn2d_kernel(x_ref, gamma_ref, beta_ref, o_ref, *, inv_l):
    # x_ref: (block_c, L) -- channels on sublanes, flattened N*H*W on lanes.
    x = x_ref[...].astype(jnp.float32)
    # One-pass statistics: both lane reductions go to the XLU back-to-back,
    # no second full-tile pass over a `centered` temporary.
    s = jnp.sum(x, axis=1, keepdims=True)
    sq = jnp.sum(x * x, axis=1, keepdims=True)
    mean = s * inv_l
    var = jnp.maximum(sq * inv_l - mean * mean, 0.0)  # clamp: cancellation
    inv_std = lax.rsqrt(var + EPS)                    # EUP slot (free-ish)
    # Fold affine into a single scale/shift: 2 VALU ops/element instead of 4.
    scale = inv_std * gamma_ref[...]          # (block_c, 1)
    shift = beta_ref[...] - mean * scale      # (block_c, 1)
    o_ref[...] = (x * scale + shift).astype(o_ref.dtype)


def batchnorm2d(x, gamma, beta):
    """Training-mode BatchNorm2d forward. x: (N, C, H, W); gamma, beta: (C,)."""
    n, c, h, w = x.shape
    l_true = n * h * w

    # NCHW -> (C, N*H*W). For N == 1 this is a pure metadata reshape (no copy,
    # no extra HBM pass); only N > 1 needs a real transpose.
    if n == 1:
        x2d = x.reshape(c, l_true)
    else:
        x2d = jnp.transpose(x, (1, 0, 2, 3)).reshape(c, l_true)

    gamma2d = gamma.reshape(c, 1).astype(jnp.float32)
    beta2d = beta.reshape(c, 1).astype(jnp.float32)

    # Per-channel stats are independent -> clean parallel grid over channels.
    # 32-channel blocks (when divisible) give v7x's 2 TCs something to split;
    # otherwise take the whole channel axis in one block.
    if c % 32 == 0 and c > 32:
        block_c = 32
    else:
        block_c = c
    grid = (c // block_c,)

    kernel = functools.partial(bn2d_kernel, inv_l=1.0 / float(l_true))

    out2d = pl.pallas_call(
        kernel,
        out_shape=jax.ShapeDtypeStruct((c, l_true), x.dtype),
        grid_spec=pltpu.PrefetchScalarGridSpec(
            num_scalar_prefetch=0,
            grid=grid,
            in_specs=[
                pl.BlockSpec((block_c, l_true), lambda i: (i, 0)),
                pl.BlockSpec((block_c, 1), lambda i: (i, 0)),
                pl.BlockSpec((block_c, 1), lambda i: (i, 0)),
            ],
            out_specs=pl.BlockSpec((block_c, l_true), lambda i: (i, 0)),
        ),
        compiler_params=pltpu.CompilerParams(
            dimension_semantics=("parallel",),  # lets v7x's 2 TCs split channels
        ),
    )(x2d, gamma2d, beta2d)

    # Restore NCHW (metadata-only for N == 1).
    if n == 1:
        return out2d.reshape(n, c, h, w)
    return jnp.transpose(out2d.reshape(c, n, h, w), (1, 0, 2, 3))


if __name__ == "__main__":
    key = jax.random.PRNGKey(0)
    N, C, H, W = 1, 64, 14, 14
    x = jax.random.normal(key, (N, C, H, W), dtype=jnp.float32)

    # PyTorch BatchNorm2d default init: weight (gamma) = 1, bias (beta) = 0
    gamma = jnp.ones((C,), dtype=jnp.float32)
    beta = jnp.zeros((C,), dtype=jnp.float32)

    # TODO(synk): running_mean/running_var (momentum=0.1) buffer updates are a
    # training side-effect and do not affect the forward output; not emitted.
    y = batchnorm2d(x, gamma, beta)
    jax.block_until_ready(y)

    # Reference check (pure JAX, training-mode batch norm, biased variance)
    mean = jnp.mean(x, axis=(0, 2, 3), keepdims=True)
    var = jnp.mean((x - mean) ** 2, axis=(0, 2, 3), keepdims=True)
    ref = (x - mean) / jnp.sqrt(var + EPS) * gamma.reshape(1, C, 1, 1) + beta.reshape(1, C, 1, 1)
    assert jnp.allclose(y, ref, atol=1e-4, rtol=1e-5), "mismatch vs reference"

    print("KERNEL_OK")
</pallas_src>

<mosaic_0001>
module attributes {stable_mosaic.version = 11 : i64} {
  func.func @bn2d_kernel(%arg0: i32, %arg1: memref<32x196xf32, #tpu.memory_space<vmem>>, %arg2: memref<32x1xf32, #tpu.memory_space<vmem>>, %arg3: memref<32x1xf32, #tpu.memory_space<vmem>>, %arg4: memref<32x196xf32, #tpu.memory_space<vmem>>) attributes {dimension_semantics = [#tpu.dimension_semantics<parallel>], iteration_bounds = array<i64: 2>, scalar_prefetch = 0 : i64, scratch_operands = 0 : i64, tpu.core_type = #tpu.core_type<tc>, window_params = [{transform_indices = @transform_0, window_bounds = array<i64: 32, 196>}, {transform_indices = @transform_1, window_bounds = array<i64: 32, 1>}, {transform_indices = @transform_2, window_bounds = array<i64: 32, 1>}, {transform_indices = @transform_3, window_bounds = array<i64: 32, 196>}]} {
    %c0 = arith.constant 0 : index
    %c0_0 = arith.constant 0 : index
    %0 = vector.load %arg1[%c0, %c0_0] : memref<32x196xf32, #tpu.memory_space<vmem>>, vector<32x196xf32>
    %cst = arith.constant dense<0.000000e+00> : vector<32xf32>
    %1 = vector.multi_reduction <add>, %0, %cst [1] : vector<32x196xf32> to vector<32xf32>
    %2 = vector.shape_cast %1 : vector<32xf32> to vector<32x1xf32>
    %3 = arith.mulf %0, %0 : vector<32x196xf32>
    %cst_1 = arith.constant dense<0.000000e+00> : vector<32xf32>
    %4 = vector.multi_reduction <add>, %3, %cst_1 [1] : vector<32x196xf32> to vector<32xf32>
    %5 = vector.shape_cast %4 : vector<32xf32> to vector<32x1xf32>
    %cst_2 = arith.constant 0.00510204071 : f32
    %6 = vector.broadcast %cst_2 : f32 to vector<32x1xf32>
    %7 = arith.mulf %2, %6 : vector<32x1xf32>
    %cst_3 = arith.constant 0.00510204071 : f32
    %8 = vector.broadcast %cst_3 : f32 to vector<32x1xf32>
    %9 = arith.mulf %5, %8 : vector<32x1xf32>
    %10 = arith.mulf %7, %7 : vector<32x1xf32>
    %11 = arith.subf %9, %10 : vector<32x1xf32>
    %cst_4 = arith.constant 0.000000e+00 : f32
    %12 = vector.broadcast %cst_4 : f32 to vector<32x1xf32>
    %13 = arith.maximumf %11, %12 : vector<32x1xf32>
    %cst_5 = arith.constant 1.000000e-03 : f32
    %14 = vector.broadcast %cst_5 : f32 to vector<32x1xf32>
    %15 = arith.addf %13, %14 : vector<32x1xf32>
    %16 = math.rsqrt %15 : vector<32x1xf32>
    %c0_6 = arith.constant 0 : index
    %c0_7 = arith.constant 0 : index
    %17 = vector.load %arg2[%c0_6, %c0_7] : memref<32x1xf32, #tpu.memory_space<vmem>>, vector<32x1xf32>
    %18 = arith.mulf %16, %17 : vector<32x1xf32>
    %c0_8 = arith.constant 0 : index
    %c0_9 = arith.constant 0 : index
    %19 = vector.load %arg3[%c0_8, %c0_9] : memref<32x1xf32, #tpu.memory_space<vmem>>, vector<32x1xf32>
    %20 = arith.mulf %7, %18 : vector<32x1xf32>
    %21 = arith.subf %19, %20 : vector<32x1xf32>
    %22 = vector.broadcast %18 : vector<32x1xf32> to vector<32x196xf32>
    %23 = arith.mulf %0, %22 : vector<32x196xf32>
    %24 = vector.broadcast %21 : vector<32x1xf32> to vector<32x196xf32>
    %25 = arith.addf %23, %24 : vector<32x196xf32>
    %c0_10 = arith.constant 0 : index
    %c0_11 = arith.constant 0 : index
    %26 = vector.load %arg4[%c0_10, %c0_11] : memref<32x196xf32, #tpu.memory_space<vmem>>, vector<32x196xf32>
    tpu.vector_store %arg4[%c0_10, %c0_11], %25 {strides = array<i32>} : memref<32x196xf32, #tpu.memory_space<vmem>>, vector<32x196xf32>,
    return
  }
  func.func @transform_0(%arg0: i32) -> (i32, i32) {
    %c0_i32 = arith.constant 0 : i32
    %c0_i32_0 = arith.constant 0 : i32
    return %arg0, %c0_i32 : i32, i32
  }
  func.func @transform_1(%arg0: i32) -> (i32, i32) {
    %c0_i32 = arith.constant 0 : i32
    %c0_i32_0 = arith.constant 0 : i32
    return %arg0, %c0_i32 : i32, i32
  }
  func.func @transform_2(%arg0: i32) -> (i32, i32) {
    %c0_i32 = arith.constant 0 : i32
    %c0_i32_0 = arith.constant 0 : i32
    return %arg0, %c0_i32 : i32, i32
  }
  func.func @transform_3(%arg0: i32) -> (i32, i32) {
    %c0_i32 = arith.constant 0 : i32
    %c0_i32_0 = arith.constant 0 : i32
    return %arg0, %c0_i32 : i32, i32
  }
}

</mosaic_0001>

<llo_original>
// kernel: tpu_custom_call.1
$region0: #{tpu_custom_call.1}
  #allocation0 [shape = 'u32[]', space=smem, size = 0x4, offset = 0x4, fixed_abs, tag = 'smem constant byte address 0x4 - core index']
  #allocation1 [shape = 'u32[144,128]{1,0:T(1,128)}', space=vmem, size = 0x12000, scoped, tag = 'internal scratch']
  %s0 = inlined_call_operand.vmem [shape: f32[64,196], index: 0, kind: input, shape index: {}]
  %s1 = inlined_call_operand.vmem [shape: f32[64,1], index: 1, kind: input, shape index: {}]
  %s2 = inlined_call_operand.vmem [shape: f32[64,1], index: 2, kind: input, shape index: {}]
  %s3 = inlined_call_operand.hbm [shape: f32[64,196], index: 3, kind: output, shape index: {}]
  %s4 = sld [smem:[#allocation0]]
  $region45: #{tpu_custom_call.1} parent=0
    _
  %s6 = ssub.s32 1, %s4
  %s7 = scalar_select 0, %s6, %s4
  $region1: #{tpu_custom_call.1} parent=0
    #allocation2 [shape = 'u8[65536]{0}', space=vmem, size = 0x10000, scoped, tag = 'output window, operand 0']
    #allocation3 [shape = 's32[2]{0}', space=sflag, size = 0x8, scoped, tag = 'scoped memory for tpu_custom_call.1']
    %8 = vsyncpa [#allocation3], 0
    %s9 = scalar_lea.sflag [#allocation3], 1
    %10 = vsyncpa %s9, 0
    loop: start=0, step=1, limit=4
    $region2: #{tpu_custom_call.1} parent=1 // loop_pre_header
      _
    $region3: #{tpu_custom_call.1} parent=1 // loop_header
      %s12 = sphi 0, %s16
      %p13 = scmp.ge.s32.totalorder %s12, 4
      %s22 = sphi 0, %s24
      %s25 = sphi 0, %s22
      %s26 = sphi 0, %s25
      %s42 = sphi 0, %s26
      %s48 = sphi 0, %s50
      %s51 = sphi 0, %s48
      %s52 = sphi 0, %s51
      %s68 = sphi 0, %s52
      %s74 = sphi 0, %s76
      %s77 = sphi 0, %s74
      %s78 = sphi 0, %s77
      %s94 = sphi 0, %s78
      %s100 = sphi 0, %s102
      %s103 = sphi 0, %s100
      %s104 = sphi 0, %s103
      %s120 = sphi 0, %s104
    $region4: #{tpu_custom_call.1} parent=1 // loop_header_branch
      %15 = sbr.rel (%p13) target = $region8
    $region5: #{tpu_custom_call.1} parent=1 // loop_body
      %s17 = ssub.s32 %s12, 1
      %s18 = ssub.s32 %s12, 2
      %s19 = sadd.s32 %s12, 1
      %s20 = ssub.s32 %s12, %s19
      %p21 = scmp.eq.s32.totalorder %s20, 0
      %s23 = sadd.s32 %s22, 1
      %s24 = scalar_select %p21, %s22, %s23
      %p27 = pneg %p21
      %p28 = scmp.eq.s32.totalorder %s12, 1
      %p29 = por %p27, %p28
      %p30 = scmp.ne.s32.totalorder %s22, %s25
      %p31 = scmp.eq.s32.totalorder %s12, 0
      %p32 = por %p30, %p31
      %p33 = scmp.ne.s32.totalorder %s22, %s25
      %p34 = scmp.eq.s32.totalorder %s17, 1
      %p35 = por %p33, %p34
      %p36 = scmp.ne.s32.totalorder %s25, %s26
      %p37 = scmp.eq.s32.totalorder %s17, 0
      %p38 = por %p36, %p37
      %p39 = scmp.ne.s32.totalorder %s25, %s26
      %p40 = scmp.eq.s32.totalorder %s18, 1
      %p41 = por %p39, %p40
      %p43 = scmp.ne.s32.totalorder %s26, %s42
      %p44 = scmp.eq.s32.totalorder %s18, 0
      %p45 = por %p43, %p44
      %s46 = ssub.s32 %s12, %s19
      %p47 = scmp.eq.s32.totalorder %s46, 0
      %s49 = sadd.s32 %s48, 1
      %s50 = scalar_select %p47, %s48, %s49
      %p53 = pneg %p47
      %p54 = scmp.eq.s32.totalorder %s12, 1
      %p55 = por %p53, %p54
      %p56 = scmp.ne.s32.totalorder %s48, %s51
      %p57 = scmp.eq.s32.totalorder %s12, 0
      %p58 = por %p56, %p57
      %p59 = scmp.ne.s32.totalorder %s48, %s51
      %p60 = scmp.eq.s32.totalorder %s17, 1
      %p61 = por %p59, %p60
      %p62 = scmp.ne.s32.totalorder %s51, %s52
      %p63 = scmp.eq.s32.totalorder %s17, 0
      %p64 = por %p62, %p63
      %p65 = scmp.ne.s32.totalorder %s51, %s52
      %p66 = scmp.eq.s32.totalorder %s18, 1
      %p67 = por %p65, %p66
      %p69 = scmp.ne.s32.totalorder %s52, %s68
      %p70 = scmp.eq.s32.totalorder %s18, 0
      %p71 = por %p69, %p70
      %s72 = ssub.s32 %s12, %s19
      %p73 = scmp.eq.s32.totalorder %s72, 0
      %s75 = sadd.s32 %s74, 1
      %s76 = scalar_select %p73, %s74, %s75
      %p79 = pneg %p73
      %p80 = scmp.eq.s32.totalorder %s12, 1
      %p81 = por %p79, %p80
      %p82 = scmp.ne.s32.totalorder %s74, %s77
      %p83 = scmp.eq.s32.totalorder %s12, 0
      %p84 = por %p82, %p83
      %p85 = scmp.ne.s32.totalorder %s74, %s77
      %p86 = scmp.eq.s32.totalorder %s17, 1
      %p87 = por %p85, %p86
      %p88 = scmp.ne.s32.totalorder %s77, %s78
      %p89 = scmp.eq.s32.totalorder %s17, 0
      %p90 = por %p88, %p89
      %p91 = scmp.ne.s32.totalorder %s77, %s78
      %p92 = scmp.eq.s32.totalorder %s18, 1
      %p93 = por %p91, %p92
      %p95 = scmp.ne.s32.totalorder %s78, %s94
      %p96 = scmp.eq.s32.totalorder %s18, 0
      %p97 = por %p95, %p96
      %s98 = ssub.s32 %s12, %s19
      %p99 = scmp.eq.s32.totalorder %s98, 0
      %s101 = sadd.s32 %s100, 1
      %s102 = scalar_select %p99, %s100, %s101
      %p105 = pneg %p99
      %p106 = scmp.eq.s32.totalorder %s12, 1
      %p107 = por %p105, %p106
      %p108 = scmp.ne.s32.totalorder %s100, %s103
      %p109 = scmp.eq.s32.totalorder %s12, 0
      %p110 = por %p108, %p109
      %p111 = scmp.ne.s32.totalorder %s100, %s103
      %p112 = scmp.eq.s32.totalorder %s17, 1
      %p113 = por %p111, %p112
      %p114 = scmp.ne.s32.totalorder %s103, %s104
      %p115 = scmp.eq.s32.totalorder %s17, 0
      %p116 = por %p114, %p115
      %p117 = scmp.ne.s32.totalorder %s103, %s104
      %p118 = scmp.eq.s32.totalorder %s18, 1
      %p119 = por %p117, %p118
      %p121 = scmp.ne.s32.totalorder %s104, %s120
      %p122 = scmp.eq.s32.totalorder %s18, 0
      %p123 = por %p121, %p122
      %p124 = scmp.le.s32.totalorder 1, %s12
      %p125 = scmp.lt.s32.totalorder %s12, 3
      %p126 = pnand %p124, %p125
      %p127 = pneg %p126
      // Predicated region
      $region9: #{tpu_custom_call.1} parent=5 // pred_check
        _
      $region10: #{tpu_custom_call.1} parent=5 // pred_check_branch
        %129 = sbr.rel (%p126) target = $region12
      $region11: #{tpu_custom_call.1} parent=5 // pred_region
        %s130 = ssub.s32 %s12, 1
      $region12: #{tpu_custom_call.1} parent=5 // pred_fallthru
        _
      %p131 = scmp.lt.s32.totalorder %s12, 2
      // Predicated region
      $region13: #{tpu_custom_call.1} parent=5 // pred_check
        %p132 = pneg %p131
      $region14: #{tpu_custom_call.1} parent=5 // pred_check_branch
        %134 = sbr.rel (%p132) target = $region16
      $region15: #{tpu_custom_call.1} parent=5 // pred_region
        // Predicated region
        $region17: #{tpu_custom_call.1} parent=15 // pred_check
          %p135 = pneg %p32
        $region18: #{tpu_custom_call.1} parent=15 // pred_check_branch
          %137 = sbr.rel (%p135) target = $region20
        $region19: #{tpu_custom_call.1} parent=15 // pred_region
          %s138 = smul.u32 4, %s12
          %p139 = scmp.lt.s32.totalorder %s138, 7
          %s140 = scalar_select %p139, %s138, 7
          %s141 = smul.addr %s140, 2
          %s142 = smul.addr %s141, 8
          %s143 = scalar_lea.vmem %s0, %s142
          %s144 = smul.u32 4, %s12
        $region20: #{tpu_custom_call.1} parent=15 // pred_fallthru
          _
        // Predicated region
        $region21: #{tpu_custom_call.1} parent=15 // pred_check
          %p145 = pneg %p58
        $region22: #{tpu_custom_call.1} parent=15 // pred_check_branch
          %147 = sbr.rel (%p145) target = $region24
        $region23: #{tpu_custom_call.1} parent=15 // pred_region
          %s148 = smul.u32 4, %s12
          %p149 = scmp.lt.s32.totalorder %s148, 7
          %s150 = scalar_select %p149, %s148, 7
          %s151 = smul.addr %s150, 8
          %s152 = scalar_lea.vmem %s1, %s151
          %s153 = smul.u32 4, %s12
        $region24: #{tpu_custom_call.1} parent=15 // pred_fallthru
          _
        // Predicated region
        $region25: #{tpu_custom_call.1} parent=15 // pred_check
          %p154 = pneg %p84
        $region26: #{tpu_custom_call.1} parent=15 // pred_check_branch
          %156 = sbr.rel (%p154) target = $region28
        $region27: #{tpu_custom_call.1} parent=15 // pred_region
          %s157 = smul.u32 4, %s12
          %p158 = scmp.lt.s32.totalorder %s157, 7
          %s159 = scalar_select %p158, %s157, 7
          %s160 = smul.addr %s159, 8
          %s161 = scalar_lea.vmem %s2, %s160
          %s162 = smul.u32 4, %s12
        $region28: #{tpu_custom_call.1} parent=15 // pred_fallthru
          _
      $region16: #{tpu_custom_call.1} parent=5 // pred_fallthru
        _
      %p163 = scmp.le.s32.totalorder 1, %s12
      %p164 = scmp.lt.s32.totalorder %s12, 3
      %p165 = pnand %p163, %p164
      %p166 = pneg %p165
      // Predicated region
      $region29: #{tpu_custom_call.1} parent=5 // pred_check
        _
      $region30: #{tpu_custom_call.1} parent=5 // pred_check_branch
        %168 = sbr.rel (%p165) target = $region32
      $region31: #{tpu_custom_call.1} parent=5 // pred_region
        %s169 = ssub.s32 %s12, 1
        %s170 = smul.u32 4, %s17
        %p171 = scmp.lt.s32.totalorder %s170, 7
        %s172 = scalar_select %p171, %s170, 7
        %s173 = smul.addr %s172, 2
        %s174 = smul.addr %s173, 8
        %s175 = scalar_lea.vmem %s0, %s174
        %p176 = pneg %p38
        %p177 = pneg %p35
        %s178 = smul.u32 4, %s17
        %p179 = scmp.lt.s32.totalorder %s178, 7
        %s180 = scalar_select %p179, %s178, 7
        %s181 = smul.addr %s180, 8
        %s182 = scalar_lea.vmem %s1, %s181
        %p183 = pneg %p64
        %p184 = pneg %p61
        %s185 = smul.u32 4, %s17
        %p186 = scmp.lt.s32.totalorder %s185, 7
        %s187 = scalar_select %p186, %s185, 7
        %s188 = smul.addr %s187, 8
        %s189 = scalar_lea.vmem %s2, %s188
        %p190 = pneg %p90
        %p191 = pneg %p87
        %p192 = pneg %p116
        %p193 = pneg %p113
        %s194 = sand.u32 %s103, 1
        %s195 = scalar_lea.sflag [#allocation3], %s194
        %s196 = sand.u32 %s103, 1
        %s197 = smul.addr %s196, 64
        %s198 = scalar_lea.vmem [#allocation2], %s197
        %s199 = smul.u32 4, %s17
        %p200 = scmp.lt.s32.totalorder %s199, 7
        %s201 = scalar_select %p200, %s199, 7
        %s202 = smul.addr %s201, 2
        %s203 = smul.addr %s202, 8
        %s204 = scalar_lea.vmem %s0, %s203
        %s205 = smul.u32 4, %s17
        %s206 = smul.u32 4, %s17
        %p207 = scmp.lt.s32.totalorder %s206, 7
        %s208 = scalar_select %p207, %s206, 7
        %s209 = smul.addr %s208, 8
        %s210 = scalar_lea.vmem %s1, %s209
        %s211 = smul.u32 4, %s17
        %s212 = smul.u32 4, %s17
        %p213 = scmp.lt.s32.totalorder %s212, 7
        %s214 = scalar_select %p213, %s212, 7
        %s215 = smul.addr %s214, 8
        %s216 = scalar_lea.vmem %s2, %s215
        %s217 = smul.u32 4, %s17
        %s218 = smul.u32 4, %s17
        %v219 = vld [vmem:[%s204] sm:$0xff]
        %v220 = vld [vmem:[%s204 + $0x8] sm:$0xff]
        %v221 = vld [vmem:[%s204 + $0x10] sm:$0xff]
        %v222 = vld [vmem:[%s204 + $0x18] sm:$0xff]
        %v223 = vld [vmem:[%s204 + $0x20] sm:$0xff]
        %v224 = vld [vmem:[%s204 + $0x28] sm:$0xff]
        %v225 = vld [vmem:[%s204 + $0x30] sm:$0xff]
        %v226 = vld [vmem:[%s204 + $0x38] sm:$0xff]
        %vm227 = vcmask 556032
        %v228 = vsel %vm227, %v220, 0.0
        %v229 = vadd.f32 %v219, %v228
        %230 = vadd.xlane.f32.xlu0 %v229
        %v231 = vpop.xlane.xlu0 %230
        %v232 = vsel %vm227, %v222, 0.0
        %v233 = vadd.f32 %v221, %v232
        %234 = vadd.xlane.f32.xlu0 %v233
        %v235 = vpop.xlane.xlu0 %234
        %v236 = vsel %vm227, %v224, 0.0
        %v237 = vadd.f32 %v223, %v236
        %238 = vadd.xlane.f32.xlu0 %v237
        %v239 = vpop.xlane.xlu0 %238
        %v240 = vsel %vm227, %v226, 0.0
        %v241 = vadd.f32 %v225, %v240
        %242 = vadd.xlane.f32.xlu0 %v241
        %v243 = vpop.xlane.xlu0 %242
        %v244 = vmul.f32 %v219, %v219
        %v245 = vmul.f32 %v220, %v220
        %v246 = vmul.f32 %v221, %v221
        %v247 = vmul.f32 %v222, %v222
        %v248 = vmul.f32 %v223, %v223
        %v249 = vmul.f32 %v224, %v224
        %v250 = vmul.f32 %v225, %v225
        %v251 = vmul.f32 %v226, %v226
        %v252 = vsel %vm227, %v245, 0.0
        %v253 = vadd.f32 %v244, %v252
        %254 = vadd.xlane.f32.xlu0 %v253
        %v255 = vpop.xlane.xlu0 %254
        %v256 = vsel %vm227, %v247, 0.0
        %v257 = vadd.f32 %v246, %v256
        %258 = vadd.xlane.f32.xlu0 %v257
        %v259 = vpop.xlane.xlu0 %258
        %v260 = vsel %vm227, %v249, 0.0
        %v261 = vadd.f32 %v248, %v260
        %262 = vadd.xlane.f32.xlu0 %v261
        %v263 = vpop.xlane.xlu0 %262
        %v264 = vsel %vm227, %v251, 0.0
        %v265 = vadd.f32 %v250, %v264
        %266 = vadd.xlane.f32.xlu0 %v265
        %v267 = vpop.xlane.xlu0 %266
        %v268 = vmul.f32 %v231, 0.0051020407
        %v269 = vmul.f32 %v235, 0.0051020407
        %v270 = vmul.f32 %v239, 0.0051020407
        %v271 = vmul.f32 %v243, 0.0051020407
        %v272 = vmul.f32 %v255, 0.0051020407
        %v273 = vmul.f32 %v259, 0.0051020407
        %v274 = vmul.f32 %v263, 0.0051020407
        %v275 = vmul.f32 %v267, 0.0051020407
        %v276 = vmul.f32 %v268, %v268
        %v277 = vmul.f32 %v269, %v269
        %v278 = vmul.f32 %v270, %v270
        %v279 = vmul.f32 %v271, %v271
        %v280 = vsub.f32 %v272, %v276
        %v281 = vsub.f32 %v273, %v277
        %v282 = vsub.f32 %v274, %v278
        %v283 = vsub.f32 %v275, %v279
        %v284 = vmax.f32 %v280, 0.0
        %v285 = vmax.f32 %v281, 0.0
        %v286 = vmax.f32 %v282, 0.0
        %v287 = vmax.f32 %v283, 0.0
        %v288 = vadd.f32 %v284, 0.001
        %v289 = vadd.f32 %v285, 0.001
        %v290 = vadd.f32 %v286, 0.001
        %v291 = vadd.f32 %v287, 0.001
        %v292 = vrsqrt.pop %v288
        %v293 = vrsqrt.pop %v289
        %v294 = vrsqrt.pop %v290
        %v295 = vrsqrt.pop %v291
        %v296 = vld [vmem:[%s210] sm:$0xff]
        %v297 = vld [vmem:[%s210 + $0x8] sm:$0xff]
        %v298 = vld [vmem:[%s210 + $0x10] sm:$0xff]
        %v299 = vld [vmem:[%s210 + $0x18] sm:$0xff]
        %v300 = vmul.f32 %v292, %v296
        %v301 = vmul.f32 %v293, %v297
        %v302 = vmul.f32 %v294, %v298
        %v303 = vmul.f32 %v295, %v299
        %v304 = vld [vmem:[%s216] sm:$0xff]
        %v305 = vld [vmem:[%s216 + $0x8] sm:$0xff]
        %v306 = vld [vmem:[%s216 + $0x10] sm:$0xff]
        %v307 = vld [vmem:[%s216 + $0x18] sm:$0xff]
        %v308 = vmul.f32 %v268, %v300
        %v309 = vmul.f32 %v269, %v301
        %v310 = vmul.f32 %v270, %v302
        %v311 = vmul.f32 %v271, %v303
        %v312 = vsub.f32 %v304, %v308
        %v313 = vsub.f32 %v305, %v309
        %v314 = vsub.f32 %v306, %v310
        %v315 = vsub.f32 %v307, %v311
        %317 = vset.pattern.permute.xlu0 0
        %318 = vperm.xlu0 %317, %v300
        %v319 = vpop.permute.xlu0 %318
        %322 = vset.pattern.permute.xlu0 0
        %323 = vperm.xlu0 %322, %v301
        %v324 = vpop.permute.xlu0 %323
        %327 = vset.pattern.permute.xlu0 0
        %328 = vperm.xlu0 %327, %v302
        %v329 = vpop.permute.xlu0 %328
        %332 = vset.pattern.permute.xlu0 0
        %333 = vperm.xlu0 %332, %v303
        %v334 = vpop.permute.xlu0 %333
        %v336 = vmul.f32 %v219, %v319
        %v337 = vmul.f32 %v220, %v319
        %v338 = vmul.f32 %v221, %v324
        %v339 = vmul.f32 %v222, %v324
        %v340 = vmul.f32 %v223, %v329
        %v341 = vmul.f32 %v224, %v329
        %v342 = vmul.f32 %v225, %v334
        %v343 = vmul.f32 %v226, %v334
        %345 = vset.pattern.permute.xlu0 0
        %346 = vperm.xlu0 %345, %v312
        %v347 = vpop.permute.xlu0 %346
        %350 = vset.pattern.permute.xlu0 0
        %351 = vperm.xlu0 %350, %v313
        %v352 = vpop.permute.xlu0 %351
        %355 = vset.pattern.permute.xlu0 0
        %356 = vperm.xlu0 %355, %v314
        %v357 = vpop.permute.xlu0 %356
        %360 = vset.pattern.permute.xlu0 0
        %361 = vperm.xlu0 %360, %v315
        %v362 = vpop.permute.xlu0 %361
        %v364 = vadd.f32 %v336, %v347
        %v365 = vadd.f32 %v337, %v347
        %v366 = vadd.f32 %v338, %v352
        %v367 = vadd.f32 %v339, %v352
        %v368 = vadd.f32 %v340, %v357
        %v369 = vadd.f32 %v341, %v357
        %v370 = vadd.f32 %v342, %v362
        %v371 = vadd.f32 %v343, %v362
        %372 = vst [vmem:[%s198] sm:$0xff] %v364
        %373 = vst.msk [vmem:[%s198 + $0x8] sm:$0xff] %vm227, %v365
        %374 = vst [vmem:[%s198 + $0x10] sm:$0xff] %v366
        %375 = vst.msk [vmem:[%s198 + $0x18] sm:$0xff] %vm227, %v367
        %376 = vst [vmem:[%s198 + $0x20] sm:$0xff] %v368
        %377 = vst.msk [vmem:[%s198 + $0x28] sm:$0xff] %vm227, %v369
        %378 = vst [vmem:[%s198 + $0x30] sm:$0xff] %v370
        %379 = vst.msk [vmem:[%s198 + $0x38] sm:$0xff] %vm227, %v371
        %s380 = sand.u32 %s103, 1
        %s381 = scalar_lea.sflag [#allocation3], %s380
        %s382 = sand.u32 %s103, 1
        %s383 = smul.addr %s382, 64
        %s384 = scalar_lea.vmem [#allocation2], %s383
        // Predicated region
        $region33: #{tpu_custom_call.1} parent=31 // pred_check
          %p385 = pneg %p113
        $region34: #{tpu_custom_call.1} parent=31 // pred_check_branch
          %387 = sbr.rel (%p385) target = $region36
        $region35: #{tpu_custom_call.1} parent=31 // pred_region
          %s388 = smul.u32 4, %s17
          %s390 = ssub.s32 1024, 1024
          %391 = vsyncadd %s381, %s390
          %s392 = smul.addr %s388, 2
          %s393 = smul.addr %s392, 128
          %s394 = scalar_lea.hbm %s3, %s393
          %s395 = sshll.u32 %s384, 4
          %s396 = int_to_ptr.vmem [resolvable:$true] %s395
          %401 = dma.vmem_to_hbm [thread:$0]  %s396, 1024, %s394, %s381, 256, 256, 16
        $region36: #{tpu_custom_call.1} parent=31 // pred_fallthru
          _
      $region32: #{tpu_custom_call.1} parent=5 // pred_fallthru
        _
      %p402 = scmp.le.s32.totalorder 2, %s12
      // Predicated region
      $region37: #{tpu_custom_call.1} parent=5 // pred_check
        %p403 = pneg %p402
      $region38: #{tpu_custom_call.1} parent=5 // pred_check_branch
        %405 = sbr.rel (%p403) target = $region40
      $region39: #{tpu_custom_call.1} parent=5 // pred_region
        %s406 = ssub.s32 %s12, 2
        // Predicated region
        $region41: #{tpu_custom_call.1} parent=39 // pred_check
          %p407 = pneg %p119
        $region42: #{tpu_custom_call.1} parent=39 // pred_check_branch
          %409 = sbr.rel (%p407) target = $region44
        $region43: #{tpu_custom_call.1} parent=39 // pred_region
          %s410 = sand.u32 %s104, 1
          %s411 = scalar_lea.sflag [#allocation3], %s410
          %s412 = sand.u32 %s104, 1
          %s413 = smul.addr %s412, 64
          %s414 = scalar_lea.vmem [#allocation2], %s413
          %415 = dma.done %s411, 1024
        $region44: #{tpu_custom_call.1} parent=39 // pred_fallthru
          _
      $region40: #{tpu_custom_call.1} parent=5 // pred_fallthru
        _
    $region6: #{tpu_custom_call.1} parent=1 // loop_footer
      %s16 = sadd.s32 1, %s12
    $region7: #{tpu_custom_call.1} parent=1 // loop_footer_branch
      %11 = sbr.rel target = $region3
    $region8: #{tpu_custom_call.1} parent=1 // loop_exit
      _
    %416 = vsyncpa [#allocation3], 1
    %s417 = scalar_lea.sflag [#allocation3], 1
    %418 = vsyncpa %s417, 1

</llo_original>
